<compile_context>
chip_gen: v6e
topology: v6e:2x2x1
jax: 0.10.0
libtpu: 0.0.40
codegen_flags: <defaults>
</compile_context>

<pallas_src>
import jax
import jax.numpy as jnp
from jax.experimental import pallas as pl
from jax.experimental.pallas import tpu as pltpu


def _span_predict_kernel(x_ref, w_ref, b_ref, mask_ref, tri_ref, out_ref):
    # x_ref   : (TB, D, S)   inputs, lane-dense in S
    # w_ref   : (2K, D)      fused [w_p; w_q] (resident)
    # b_ref   : (2K, 1)      fused [b_p; b_q] (resident)
    # mask_ref: (TB, 1, S)   token mask, lane-dense in S
    # tri_ref : (S, S)       tri[j, i] = 1 if j <= i  (cumsum-by-matmul operator)
    # out_ref : (TB, K, S)
    wT = w_ref[...]
    bias = b_ref[...]
    tri = tri_ref[...]

    TB = x_ref.shape[0]
    K2 = wT.shape[0]
    K = K2 // 2
    S = tri.shape[0]

    # Fused p/q linear, unrolled over the TB batch rows of this step and
    # stacked into one (TB*2K, S) slab so every row-wise op below runs with
    # the long sequence axis on the 128-lane dimension.
    logits = jnp.concatenate(
        [jnp.dot(wT, x_ref[b], preferred_element_type=jnp.float32) + bias
         for b in range(TB)],
        axis=0)                                                  # (TB*2K, S)

    # Softmax over the sequence axis (torch dim=1) == lane axis here.
    # Denominator reciprocal on the EUP path (kept exact for f32 agreement).
    m = jnp.max(logits, axis=-1, keepdims=True)
    e = jnp.exp(logits - m)
    probs = e * pl.reciprocal(jnp.sum(e, axis=-1, keepdims=True))  # (TB*2K, S)

    # Single triangular matmul: forward cumsum along S for ALL rows at once.
    cum = jnp.dot(probs, tri, preferred_element_type=jnp.float32)  # (TB*2K, S)

    cum = cum.reshape(TB, K2, S)
    probs = probs.reshape(TB, K2, S)

    p = cum[:, :K, :]                                            # cumsum(p_tilde)
    q_tilde = probs[:, K:, :]
    # reverse cumsum:  q[i] = total - cumsum[i] + q_tilde[i]
    q = jnp.sum(q_tilde, axis=-1, keepdims=True) - cum[:, K:, :] + q_tilde

    # Per-span product, normalize over S, apply token mask — one fused tail.
    r = p * q                                                    # (TB, K, S)
    inv = pl.reciprocal(jnp.sum(r, axis=-1, keepdims=True) + 1e-8)
    out_ref[...] = r * inv * mask_ref[...]


def _pick_block_b(B, max_tb=16):
    """Largest divisor of B that keeps >= 2 grid steps (megacore) and <= max_tb."""
    best = 1
    for tb in range(1, min(B, max_tb) + 1):
        if B % tb == 0 and (B // tb >= 2 or B == 1):
            best = tb
    return best


def span_predict(inputs, token_mask, w_p, b_p, w_q, b_q, *, block_b=None):
    """inputs: (B, S, D) f32; token_mask: (B, S); w_*: (D, K); b_*: (K,)."""
    B, S, D = inputs.shape
    K = w_p.shape[1]
    TB = _pick_block_b(B) if block_b is None else block_b
    assert B % TB == 0

    # Fused weights / bias: rows 0..K-1 are the p-head, rows K..2K-1 the q-head.
    w_pq_T = jnp.concatenate([w_p, w_q], axis=1).T.astype(jnp.float32)      # (2K, D)
    b_pq = jnp.concatenate([b_p, b_q], axis=0).reshape(2 * K, 1).astype(jnp.float32)

    # Lane-dense layouts: sequence axis S last.
    xT = jnp.transpose(inputs, (0, 2, 1)).astype(jnp.float32)               # (B, D, S)
    maskT = token_mask.reshape(B, 1, S).astype(jnp.float32)                 # (B, 1, S)

    # Resident cumsum operator: tri[j, i] = 1 iff j <= i, so probs @ tri is a
    # forward cumsum along the lane (S) axis. Built once, never re-fetched.
    tri = jnp.triu(jnp.ones((S, S), jnp.float32))

    out_ks = pl.pallas_call(
        _span_predict_kernel,
        out_shape=jax.ShapeDtypeStruct((B, K, S), jnp.float32),
        grid=(B // TB,),
        in_specs=[
            pl.BlockSpec((TB, D, S), lambda b: (b, 0, 0)),    # xT
            pl.BlockSpec((2 * K, D), lambda b: (0, 0)),       # fused weights (resident)
            pl.BlockSpec((2 * K, 1), lambda b: (0, 0)),       # fused bias    (resident)
            pl.BlockSpec((TB, 1, S), lambda b: (b, 0, 0)),    # token mask
            pl.BlockSpec((S, S), lambda b: (0, 0)),           # cumsum operator (resident)
        ],
        out_specs=pl.BlockSpec((TB, K, S), lambda b: (b, 0, 0)),
        compiler_params=pltpu.CompilerParams(
            dimension_semantics=("parallel",),
            vmem_limit_bytes=32 * 1024 * 1024,
        ),
    )(xT, w_pq_T, b_pq, maskT, tri)

    # Back to torch layout (B, S, K).
    return jnp.transpose(out_ks, (0, 2, 1))


def span_predict_ref(inputs, token_mask, w_p, b_p, w_q, b_q):
    """Pure-JAX reference mirroring the torch forward."""
    p_tilde = jax.nn.softmax(inputs @ w_p + b_p, axis=1)
    q_tilde = jax.nn.softmax(inputs @ w_q + b_q, axis=1)
    p = jnp.cumsum(p_tilde, axis=1)
    q = jnp.flip(jnp.cumsum(jnp.flip(q_tilde, axis=1), axis=1), axis=1)
    r = p * q
    r = r / (jnp.sum(r, axis=1, keepdims=True) + 1e-8)
    return r * token_mask[:, :, None]


if __name__ == "__main__":
    B, S, D, K = 2, 16, 32, 4   # batch, seq, input_dims, num_spans

    key = jax.random.PRNGKey(0)
    k1, k2, k3, k4, k5, k6 = jax.random.split(key, 6)

    inputs = jax.random.normal(k1, (B, S, D), dtype=jnp.float32)
    token_mask = (jax.random.uniform(k2, (B, S)) > 0.2).astype(jnp.float32)

    # Deterministic synthetic parameters (nn.Linear(input_dims, num_spans) x2),
    # stored as (D, K) i.e. transposed w.r.t. torch's (K, D).
    w_p = jax.random.normal(k3, (D, K), dtype=jnp.float32) * 0.1
    b_p = jax.random.normal(k4, (K,), dtype=jnp.float32) * 0.1
    w_q = jax.random.normal(k5, (D, K), dtype=jnp.float32) * 0.1
    b_q = jax.random.normal(k6, (K,), dtype=jnp.float32) * 0.1

    out = span_predict(inputs, token_mask, w_p, b_p, w_q, b_q)
    jax.block_until_ready(out)

    ref = span_predict_ref(inputs, token_mask, w_p, b_p, w_q, b_q)
    assert out.shape == (B, S, K)
    assert jnp.allclose(out, ref, atol=1e-5, rtol=1e-5), "mismatch vs reference"

    print("KERNEL_OK")
</pallas_src>

<mosaic_0001>
module attributes {stable_mosaic.version = 11 : i64} {
  func.func @_span_predict_kernel(%arg0: i32, %arg1: memref<1x32x16xf32, #tpu.memory_space<vmem>>, %arg2: memref<8x32xf32, #tpu.memory_space<vmem>>, %arg3: memref<8x1xf32, #tpu.memory_space<vmem>>, %arg4: memref<1x1x16xf32, #tpu.memory_space<vmem>>, %arg5: memref<16x16xf32, #tpu.memory_space<vmem>>, %arg6: memref<1x4x16xf32, #tpu.memory_space<vmem>>) attributes {dimension_semantics = [#tpu.dimension_semantics<parallel>], iteration_bounds = array<i64: 2>, scalar_prefetch = 0 : i64, scratch_operands = 0 : i64, tpu.core_type = #tpu.core_type<tc>, window_params = [{transform_indices = @transform_0, window_bounds = array<i64: 1, 32, 16>}, {pipeline_mode = #tpu.pipeline_mode<synchronous>, transform_indices = @transform_1, window_bounds = array<i64: 8, 32>}, {pipeline_mode = #tpu.pipeline_mode<synchronous>, transform_indices = @transform_2, window_bounds = array<i64: 8, 1>}, {transform_indices = @transform_3, window_bounds = array<i64: 1, 1, 16>}, {pipeline_mode = #tpu.pipeline_mode<synchronous>, transform_indices = @transform_4, window_bounds = array<i64: 16, 16>}, {transform_indices = @transform_5, window_bounds = array<i64: 1, 4, 16>}]} {
    %c0 = arith.constant 0 : index
    %c0_0 = arith.constant 0 : index
    %0 = vector.load %arg2[%c0, %c0_0] : memref<8x32xf32, #tpu.memory_space<vmem>>, vector<8x32xf32>
    %c0_1 = arith.constant 0 : index
    %c0_2 = arith.constant 0 : index
    %1 = vector.load %arg3[%c0_1, %c0_2] : memref<8x1xf32, #tpu.memory_space<vmem>>, vector<8x1xf32>
    %c0_3 = arith.constant 0 : index
    %c0_4 = arith.constant 0 : index
    %2 = vector.load %arg5[%c0_3, %c0_4] : memref<16x16xf32, #tpu.memory_space<vmem>>, vector<16x16xf32>
    %c0_5 = arith.constant 0 : index
    %c0_6 = arith.constant 0 : index
    %c0_7 = arith.constant 0 : index
    %3 = vector.load %arg1[%c0_5, %c0_6, %c0_7] : memref<1x32x16xf32, #tpu.memory_space<vmem>>, vector<1x32x16xf32>
    %4 = vector.shape_cast %3 : vector<1x32x16xf32> to vector<32x16xf32>
    %cst = arith.constant dense<0.000000e+00> : vector<8x16xf32>
    %5 = tpu.matmul %0, %4, %cst {dimension_numbers = #tpu.dot_dimension_numbers<[1], [0], [0], [1], [0, 0, 1, 1], [], []>} : vector<8x32xf32>, vector<32x16xf32>, vector<8x16xf32> -> vector<8x16xf32>
    %6 = vector.broadcast %1 : vector<8x1xf32> to vector<8x16xf32>
    %7 = arith.addf %5, %6 : vector<8x16xf32>
    %cst_8 = arith.constant dense<0xFF800000> : vector<8xf32>
    %8 = vector.multi_reduction <maximumf>, %7, %cst_8 [1] : vector<8x16xf32> to vector<8xf32>
    %9 = vector.shape_cast %8 : vector<8xf32> to vector<8x1xf32>
    %10 = vector.broadcast %9 : vector<8x1xf32> to vector<8x16xf32>
    %11 = arith.subf %7, %10 : vector<8x16xf32>
    %12 = math.exp %11 : vector<8x16xf32>
    %cst_9 = arith.constant dense<0.000000e+00> : vector<8xf32>
    %13 = vector.multi_reduction <add>, %12, %cst_9 [1] : vector<8x16xf32> to vector<8xf32>
    %14 = vector.shape_cast %13 : vector<8xf32> to vector<8x1xf32>
    %15 = tpu.reciprocal %14 : vector<8x1xf32> -> vector<8x1xf32>
    %16 = vector.broadcast %15 : vector<8x1xf32> to vector<8x16xf32>
    %17 = arith.mulf %12, %16 : vector<8x16xf32>
    %cst_10 = arith.constant dense<0.000000e+00> : vector<8x16xf32>
    %18 = tpu.matmul %17, %2, %cst_10 {dimension_numbers = #tpu.dot_dimension_numbers<[1], [0], [0], [1], [0, 0, 1, 1], [], []>} : vector<8x16xf32>, vector<16x16xf32>, vector<8x16xf32> -> vector<8x16xf32>
    %19 = vector.shape_cast %18 : vector<8x16xf32> to vector<1x8x16xf32>
    %20 = vector.shape_cast %17 : vector<8x16xf32> to vector<1x8x16xf32>
    %21 = vector.extract_strided_slice %19 {offsets = [0, 0, 0], sizes = [1, 4, 16], strides = [1, 1, 1]} : vector<1x8x16xf32> to vector<1x4x16xf32>
    %22 = vector.extract_strided_slice %20 {offsets = [0, 4, 0], sizes = [1, 4, 16], strides = [1, 1, 1]} : vector<1x8x16xf32> to vector<1x4x16xf32>
    %cst_11 = arith.constant dense<0.000000e+00> : vector<1x4xf32>
    %23 = vector.multi_reduction <add>, %22, %cst_11 [2] : vector<1x4x16xf32> to vector<1x4xf32>
    %24 = vector.shape_cast %23 : vector<1x4xf32> to vector<1x4x1xf32>
    %25 = vector.extract_strided_slice %19 {offsets = [0, 4, 0], sizes = [1, 4, 16], strides = [1, 1, 1]} : vector<1x8x16xf32> to vector<1x4x16xf32>
    %26 = vector.broadcast %24 : vector<1x4x1xf32> to vector<1x4x16xf32>
    %27 = arith.subf %26, %25 : vector<1x4x16xf32>
    %28 = arith.addf %27, %22 : vector<1x4x16xf32>
    %29 = arith.mulf %21, %28 : vector<1x4x16xf32>
    %cst_12 = arith.constant dense<0.000000e+00> : vector<1x4xf32>
    %30 = vector.multi_reduction <add>, %29, %cst_12 [2] : vector<1x4x16xf32> to vector<1x4xf32>
    %31 = vector.shape_cast %30 : vector<1x4xf32> to vector<1x4x1xf32>
    %cst_13 = arith.constant 9.99999993E-9 : f32
    %32 = vector.broadcast %cst_13 : f32 to vector<1x4x1xf32>
    %33 = arith.addf %31, %32 : vector<1x4x1xf32>
    %34 = tpu.reciprocal %33 : vector<1x4x1xf32> -> vector<1x4x1xf32>
    %35 = vector.broadcast %34 : vector<1x4x1xf32> to vector<1x4x16xf32>
    %36 = arith.mulf %29, %35 : vector<1x4x16xf32>
    %c0_14 = arith.constant 0 : index
    %c0_15 = arith.constant 0 : index
    %c0_16 = arith.constant 0 : index
    %37 = vector.load %arg4[%c0_14, %c0_15, %c0_16] : memref<1x1x16xf32, #tpu.memory_space<vmem>>, vector<1x1x16xf32>
    %38 = vector.broadcast %37 : vector<1x1x16xf32> to vector<1x4x16xf32>
    %39 = arith.mulf %36, %38 : vector<1x4x16xf32>
    %c0_17 = arith.constant 0 : index
    %c0_18 = arith.constant 0 : index
    %c0_19 = arith.constant 0 : index
    %40 = vector.load %arg6[%c0_17, %c0_18, %c0_19] : memref<1x4x16xf32, #tpu.memory_space<vmem>>, vector<1x4x16xf32>
    tpu.vector_store %arg6[%c0_17, %c0_18, %c0_19], %39 {strides = array<i32>} : memref<1x4x16xf32, #tpu.memory_space<vmem>>, vector<1x4x16xf32>,
    return
  }
  func.func @transform_0(%arg0: i32) -> (i32, i32, i32) {
    %c0_i32 = arith.constant 0 : i32
    %c0_i32_0 = arith.constant 0 : i32
    %c0_i32_1 = arith.constant 0 : i32
    return %arg0, %c0_i32, %c0_i32_0 : i32, i32, i32
  }
  func.func @transform_1(%arg0: i32) -> (i32, i32) {
    %c0_i32 = arith.constant 0 : i32
    %c0_i32_0 = arith.constant 0 : i32
    %c0_i32_1 = arith.constant 0 : i32
    return %c0_i32, %c0_i32_0 : i32, i32
  }
  func.func @transform_2(%arg0: i32) -> (i32, i32) {
    %c0_i32 = arith.constant 0 : i32
    %c0_i32_0 = arith.constant 0 : i32
    %c0_i32_1 = arith.constant 0 : i32
    return %c0_i32, %c0_i32_0 : i32, i32
  }
  func.func @transform_3(%arg0: i32) -> (i32, i32, i32) {
    %c0_i32 = arith.constant 0 : i32
    %c0_i32_0 = arith.constant 0 : i32
    %c0_i32_1 = arith.constant 0 : i32
    return %arg0, %c0_i32, %c0_i32_0 : i32, i32, i32
  }
  func.func @transform_4(%arg0: i32) -> (i32, i32) {
    %c0_i32 = arith.constant 0 : i32
    %c0_i32_0 = arith.constant 0 : i32
    %c0_i32_1 = arith.constant 0 : i32
    return %c0_i32, %c0_i32_0 : i32, i32
  }
  func.func @transform_5(%arg0: i32) -> (i32, i32, i32) {
    %c0_i32 = arith.constant 0 : i32
    %c0_i32_0 = arith.constant 0 : i32
    %c0_i32_1 = arith.constant 0 : i32
    return %arg0, %c0_i32, %c0_i32_0 : i32, i32, i32
  }
}

</mosaic_0001>

<llo_original>
// kernel: tpu_custom_call.1
$region0: #{tpu_custom_call.1}
  #allocation0 [shape = 'u32[]', space=smem, size = 0x4, offset = 0x4, fixed_abs, tag = 'smem constant byte address 0x4 - core index']
  #allocation1 [shape = 'u32[144,128]{1,0:T(1,128)}', space=vmem, size = 0x12000, scoped, tag = 'internal scratch']
  %s0 = inlined_call_operand.vmem [shape: f32[2,32,16], index: 0, kind: input, shape index: {}]
  %s1 = inlined_call_operand.vmem [shape: f32[8,32], index: 1, kind: input, shape index: {}]
  %s2 = inlined_call_operand.vmem [shape: f32[8,1], index: 2, kind: input, shape index: {}]
  %s3 = inlined_call_operand.vmem [shape: f32[2,1,16], index: 3, kind: input, shape index: {}]
  %s4 = inlined_call_operand.vmem [shape: f32[16,16], index: 4, kind: input, shape index: {}]
  %s5 = inlined_call_operand.hbm [shape: f32[2,4,16], index: 5, kind: output, shape index: {}]
  %s6 = sld [smem:[#allocation0]]
  $region53: #{tpu_custom_call.1} parent=0
    _
  %s8 = ssub.s32 1, %s6
  %s9 = scalar_select 0, %s8, %s6
  $region1: #{tpu_custom_call.1} parent=0
    #allocation2 [shape = 'u8[4096]{0}', space=vmem, size = 0x1000, scoped, tag = 'output window, operand 0']
    #allocation3 [shape = 's32[2]{0}', space=sflag, size = 0x8, scoped, tag = 'scoped memory for tpu_custom_call.1']
    %10 = vsyncpa [#allocation3], 0
    %s11 = scalar_lea.sflag [#allocation3], 1
    %12 = vsyncpa %s11, 0
    loop: start=0, step=1, limit=4
    $region2: #{tpu_custom_call.1} parent=1 // loop_pre_header
      _
    $region3: #{tpu_custom_call.1} parent=1 // loop_header
      %s14 = sphi 0, %s18
      %p15 = scmp.ge.s32.totalorder %s14, 4
      %s24 = sphi 0, %s26
      %s27 = sphi 0, %s24
      %s28 = sphi 0, %s27
      %s44 = sphi 0, %s28
      %s48 = sphi 0, %s48
      %s50 = sphi 0, %s48
      %s51 = sphi 0, %s50
      %s65 = sphi 0, %s51
      %s69 = sphi 0, %s69
      %s71 = sphi 0, %s69
      %s72 = sphi 0, %s71
      %s86 = sphi 0, %s72
      %s92 = sphi 0, %s94
      %s95 = sphi 0, %s92
      %s96 = sphi 0, %s95
      %s112 = sphi 0, %s96
      %s116 = sphi 0, %s116
      %s118 = sphi 0, %s116
      %s119 = sphi 0, %s118
      %s133 = sphi 0, %s119
      %s139 = sphi 0, %s141
      %s142 = sphi 0, %s139
      %s143 = sphi 0, %s142
      %s159 = sphi 0, %s143
    $region4: #{tpu_custom_call.1} parent=1 // loop_header_branch
      %17 = sbr.rel (%p15) target = $region8
    $region5: #{tpu_custom_call.1} parent=1 // loop_body
      %s19 = ssub.s32 %s14, 1
      %s20 = ssub.s32 %s14, 2
      %s21 = sadd.s32 %s14, 1
      %s22 = ssub.s32 %s14, %s21
      %p23 = scmp.eq.s32.totalorder %s22, 0
      %s25 = sadd.s32 %s24, 1
      %s26 = scalar_select %p23, %s24, %s25
      %p29 = pneg %p23
      %p30 = scmp.eq.s32.totalorder %s14, 1
      %p31 = por %p29, %p30
      %p32 = scmp.ne.s32.totalorder %s24, %s27
      %p33 = scmp.eq.s32.totalorder %s14, 0
      %p34 = por %p32, %p33
      %p35 = scmp.ne.s32.totalorder %s24, %s27
      %p36 = scmp.eq.s32.totalorder %s19, 1
      %p37 = por %p35, %p36
      %p38 = scmp.ne.s32.totalorder %s27, %s28
      %p39 = scmp.eq.s32.totalorder %s19, 0
      %p40 = por %p38, %p39
      %p41 = scmp.ne.s32.totalorder %s27, %s28
      %p42 = scmp.eq.s32.totalorder %s20, 1
      %p43 = por %p41, %p42
      %p45 = scmp.ne.s32.totalorder %s28, %s44
      %p46 = scmp.eq.s32.totalorder %s20, 0
      %p47 = por %p45, %p46
      %s49 = sadd.s32 %s48, 1
      %p52 = scmp.eq.s32.totalorder %s14, 1
      %p53 = scmp.ne.s32.totalorder %s48, %s50
      %p54 = scmp.eq.s32.totalorder %s14, 0
      %p55 = por %p53, %p54
      %p56 = scmp.ne.s32.totalorder %s48, %s50
      %p57 = scmp.eq.s32.totalorder %s19, 1
      %p58 = por %p56, %p57
      %p59 = scmp.ne.s32.totalorder %s50, %s51
      %p60 = scmp.eq.s32.totalorder %s19, 0
      %p61 = por %p59, %p60
      %p62 = scmp.ne.s32.totalorder %s50, %s51
      %p63 = scmp.eq.s32.totalorder %s20, 1
      %p64 = por %p62, %p63
      %p66 = scmp.ne.s32.totalorder %s51, %s65
      %p67 = scmp.eq.s32.totalorder %s20, 0
      %p68 = por %p66, %p67
      %s70 = sadd.s32 %s69, 1
      %p73 = scmp.eq.s32.totalorder %s14, 1
      %p74 = scmp.ne.s32.totalorder %s69, %s71
      %p75 = scmp.eq.s32.totalorder %s14, 0
      %p76 = por %p74, %p75
      %p77 = scmp.ne.s32.totalorder %s69, %s71
      %p78 = scmp.eq.s32.totalorder %s19, 1
      %p79 = por %p77, %p78
      %p80 = scmp.ne.s32.totalorder %s71, %s72
      %p81 = scmp.eq.s32.totalorder %s19, 0
      %p82 = por %p80, %p81
      %p83 = scmp.ne.s32.totalorder %s71, %s72
      %p84 = scmp.eq.s32.totalorder %s20, 1
      %p85 = por %p83, %p84
      %p87 = scmp.ne.s32.totalorder %s72, %s86
      %p88 = scmp.eq.s32.totalorder %s20, 0
      %p89 = por %p87, %p88
      %s90 = ssub.s32 %s14, %s21
      %p91 = scmp.eq.s32.totalorder %s90, 0
      %s93 = sadd.s32 %s92, 1
      %s94 = scalar_select %p91, %s92, %s93
      %p97 = pneg %p91
      %p98 = scmp.eq.s32.totalorder %s14, 1
      %p99 = por %p97, %p98
      %p100 = scmp.ne.s32.totalorder %s92, %s95
      %p101 = scmp.eq.s32.totalorder %s14, 0
      %p102 = por %p100, %p101
      %p103 = scmp.ne.s32.totalorder %s92, %s95
      %p104 = scmp.eq.s32.totalorder %s19, 1
      %p105 = por %p103, %p104
      %p106 = scmp.ne.s32.totalorder %s95, %s96
      %p107 = scmp.eq.s32.totalorder %s19, 0
      %p108 = por %p106, %p107
      %p109 = scmp.ne.s32.totalorder %s95, %s96
      %p110 = scmp.eq.s32.totalorder %s20, 1
      %p111 = por %p109, %p110
      %p113 = scmp.ne.s32.totalorder %s96, %s112
      %p114 = scmp.eq.s32.totalorder %s20, 0
      %p115 = por %p113, %p114
      %s117 = sadd.s32 %s116, 1
      %p120 = scmp.eq.s32.totalorder %s14, 1
      %p121 = scmp.ne.s32.totalorder %s116, %s118
      %p122 = scmp.eq.s32.totalorder %s14, 0
      %p123 = por %p121, %p122
      %p124 = scmp.ne.s32.totalorder %s116, %s118
      %p125 = scmp.eq.s32.totalorder %s19, 1
      %p126 = por %p124, %p125
      %p127 = scmp.ne.s32.totalorder %s118, %s119
      %p128 = scmp.eq.s32.totalorder %s19, 0
      %p129 = por %p127, %p128
      %p130 = scmp.ne.s32.totalorder %s118, %s119
      %p131 = scmp.eq.s32.totalorder %s20, 1
      %p132 = por %p130, %p131
      %p134 = scmp.ne.s32.totalorder %s119, %s133
      %p135 = scmp.eq.s32.totalorder %s20, 0
      %p136 = por %p134, %p135
      %s137 = ssub.s32 %s14, %s21
      %p138 = scmp.eq.s32.totalorder %s137, 0
      %s140 = sadd.s32 %s139, 1
      %s141 = scalar_select %p138, %s139, %s140
      %p144 = pneg %p138
      %p145 = scmp.eq.s32.totalorder %s14, 1
      %p146 = por %p144, %p145
      %p147 = scmp.ne.s32.totalorder %s139, %s142
      %p148 = scmp.eq.s32.totalorder %s14, 0
      %p149 = por %p147, %p148
      %p150 = scmp.ne.s32.totalorder %s139, %s142
      %p151 = scmp.eq.s32.totalorder %s19, 1
      %p152 = por %p150, %p151
      %p153 = scmp.ne.s32.totalorder %s142, %s143
      %p154 = scmp.eq.s32.totalorder %s19, 0
      %p155 = por %p153, %p154
      %p156 = scmp.ne.s32.totalorder %s142, %s143
      %p157 = scmp.eq.s32.totalorder %s20, 1
      %p158 = por %p156, %p157
      %p160 = scmp.ne.s32.totalorder %s143, %s159
      %p161 = scmp.eq.s32.totalorder %s20, 0
      %p162 = por %p160, %p161
      %p163 = scmp.le.s32.totalorder 1, %s14
      %p164 = scmp.lt.s32.totalorder %s14, 3
      %p165 = pnand %p163, %p164
      %p166 = pneg %p165
      // Predicated region
      $region9: #{tpu_custom_call.1} parent=5 // pred_check
        _
      $region10: #{tpu_custom_call.1} parent=5 // pred_check_branch
        %168 = sbr.rel (%p165) target = $region12
      $region11: #{tpu_custom_call.1} parent=5 // pred_region
        %s169 = ssub.s32 %s14, 1
        // Predicated region
        $region13: #{tpu_custom_call.1} parent=11 // pred_check
          %p170 = pneg %p61
        $region14: #{tpu_custom_call.1} parent=11 // pred_check_branch
          %172 = sbr.rel (%p170) target = $region16
        $region15: #{tpu_custom_call.1} parent=11 // pred_region
          _
        $region16: #{tpu_custom_call.1} parent=11 // pred_fallthru
          _
        // Predicated region
        $region17: #{tpu_custom_call.1} parent=11 // pred_check
          %p173 = pneg %p82
        $region18: #{tpu_custom_call.1} parent=11 // pred_check_branch
          %175 = sbr.rel (%p173) target = $region20
        $region19: #{tpu_custom_call.1} parent=11 // pred_region
          _
        $region20: #{tpu_custom_call.1} parent=11 // pred_fallthru
          _
        // Predicated region
        $region21: #{tpu_custom_call.1} parent=11 // pred_check
          %p176 = pneg %p129
        $region22: #{tpu_custom_call.1} parent=11 // pred_check_branch
          %178 = sbr.rel (%p176) target = $region24
        $region23: #{tpu_custom_call.1} parent=11 // pred_region
          _
        $region24: #{tpu_custom_call.1} parent=11 // pred_fallthru
          _
      $region12: #{tpu_custom_call.1} parent=5 // pred_fallthru
        _
      %p179 = scmp.lt.s32.totalorder %s14, 2
      // Predicated region
      $region25: #{tpu_custom_call.1} parent=5 // pred_check
        %p180 = pneg %p179
      $region26: #{tpu_custom_call.1} parent=5 // pred_check_branch
        %182 = sbr.rel (%p180) target = $region28
      $region27: #{tpu_custom_call.1} parent=5 // pred_region
        // Predicated region
        $region29: #{tpu_custom_call.1} parent=27 // pred_check
          %p183 = pneg %p34
        $region30: #{tpu_custom_call.1} parent=27 // pred_check_branch
          %185 = sbr.rel (%p183) target = $region32
        $region31: #{tpu_custom_call.1} parent=27 // pred_region
          %p186 = scmp.lt.s32.totalorder %s14, 1
          %s187 = scalar_select %p186, %s14, 1
          %s188 = smul.addr %s187, 4
          %s189 = smul.addr %s188, 8
          %s190 = scalar_lea.vmem %s0, %s189
        $region32: #{tpu_custom_call.1} parent=27 // pred_fallthru
          _
        // Predicated region
        $region33: #{tpu_custom_call.1} parent=27 // pred_check
          %p191 = pneg %p102
        $region34: #{tpu_custom_call.1} parent=27 // pred_check_branch
          %193 = sbr.rel (%p191) target = $region36
        $region35: #{tpu_custom_call.1} parent=27 // pred_region
          %p194 = scmp.lt.s32.totalorder %s14, 1
          %s195 = scalar_select %p194, %s14, 1
          %s196 = scalar_lea.vmem %s3, %s195
        $region36: #{tpu_custom_call.1} parent=27 // pred_fallthru
          _
      $region28: #{tpu_custom_call.1} parent=5 // pred_fallthru
        _
      %p197 = scmp.le.s32.totalorder 1, %s14
      %p198 = scmp.lt.s32.totalorder %s14, 3
      %p199 = pnand %p197, %p198
      %p200 = pneg %p199
      // Predicated region
      $region37: #{tpu_custom_call.1} parent=5 // pred_check
        _
      $region38: #{tpu_custom_call.1} parent=5 // pred_check_branch
        %202 = sbr.rel (%p199) target = $region40
      $region39: #{tpu_custom_call.1} parent=5 // pred_region
        %s203 = ssub.s32 %s14, 1
        %p204 = scmp.lt.s32.totalorder %s19, 1
        %s205 = scalar_select %p204, %s19, 1
        %s206 = smul.addr %s205, 4
        %s207 = smul.addr %s206, 8
        %s208 = scalar_lea.vmem %s0, %s207
        %p209 = pneg %p40
        %p210 = pneg %p37
        %p211 = pneg %p61
        %p212 = pneg %p58
        %p213 = pneg %p82
        %p214 = pneg %p79
        %p215 = scmp.lt.s32.totalorder %s19, 1
        %s216 = scalar_select %p215, %s19, 1
        %s217 = scalar_lea.vmem %s3, %s216
        %p218 = pneg %p108
        %p219 = pneg %p105
        %p220 = pneg %p129
        %p221 = pneg %p126
        %p222 = pneg %p155
        %p223 = pneg %p152
        %s224 = sand.u32 %s142, 1
        %s225 = scalar_lea.sflag [#allocation3], %s224
        %s226 = sand.u32 %s142, 1
        %s227 = smul.addr %s226, 4
        %s228 = scalar_lea.vmem [#allocation2], %s227
        %p229 = scmp.lt.s32.totalorder %s19, 1
        %s230 = scalar_select %p229, %s19, 1
        %s231 = smul.addr %s230, 4
        %s232 = smul.addr %s231, 8
        %s233 = scalar_lea.vmem %s0, %s232
        %p234 = scmp.lt.s32.totalorder %s19, 1
        %s235 = scalar_select %p234, %s19, 1
        %s236 = scalar_lea.vmem %s3, %s235
        %v237 = vld [vmem:[%s1] sm:$0xff]
        %v238 = vld [vmem:[%s2] sm:$0xff]
        %v239 = vld [vmem:[%s4] sm:$0xff]
        %v240 = vld [vmem:[%s4 + $0x8] sm:$0xff]
        %v241 = vld [vmem:[%s233] sm:$0xff]
        %v242 = vld [vmem:[%s233 + $0x8] sm:$0xff]
        %v243 = vld [vmem:[%s233 + $0x10] sm:$0xff]
        %v244 = vld [vmem:[%s233 + $0x18] sm:$0xff]
        %246 = vset.pattern.permute.xlu0 0
        %247 = vperm.xlu0 %246, %v238
        %v248 = vpop.permute.xlu0 %247
        %vm250 = vcmask 261120
        %v252 = vsel %vm250, %v237, 0
        %254 = vmatprep.subr.mxu0 0.0
        %255 = vmatpush1.msra.mxu0 0.0
        %256 = vmatprep.subr.mxu0 0.0
        %257 = vmatpush1.msra.mxu0 0.0
        %258 = vmatprep.subr.mxu0 0.0
        %259 = vmatpush1.msra.mxu0 0.0
        %260 = vmatprep.subr.mxu0 0.0
        %261 = vmatpush1.msra.mxu0 0.0
        %262 = vmatprep.subr.mxu0 0.0
        %263 = vmatpush1.msra.mxu0 0.0
        %264 = vmatprep.subr.mxu0 0.0
        %265 = vmatpush1.msra.mxu0 0.0
        %266 = vmatprep.subr.mxu0 0.0
        %267 = vmatpush1.msra.mxu0 0.0
        %268 = vmatprep.subr.mxu0 0.0
        %269 = vmatpush1.msra.mxu0 0.0
        %270 = vmatprep.subr.mxu0 0.0
        %271 = vmatpush1.msra.mxu0 0.0
        %272 = vmatprep.subr.mxu0 0.0
        %273 = vmatpush1.msra.mxu0 0.0
        %274 = vmatprep.subr.mxu0 0.0
        %275 = vmatpush1.msra.mxu0 0.0
        %276 = vmatprep.subr.mxu0 0.0
        %277 = vmatpush1.msra.mxu0 0.0
        %278 = vmatprep.subr.mxu0 0.0
        %279 = vmatpush1.msra.mxu0 %v244
        %280 = vmatprep.subr.mxu0 0.0
        %281 = vmatpush1.msra.mxu0 %v243
        %282 = vmatprep.subr.mxu0 0.0
        %283 = vmatpush1.msra.mxu0 %v242
        %284 = vmatprep.subr.mxu0 0.0
        %285 = vmatpush1.msra.mxu0 %v241
        %286 = vmatprep.subr.mxu0 0.0
        %287 = vmatpush2.msra.mxu0 0.0
        %288 = vmatprep.subr.mxu0 0.0
        %289 = vmatpush2.msra.mxu0 0.0
        %290 = vmatprep.subr.mxu0 0.0
        %291 = vmatpush2.msra.mxu0 0.0
        %292 = vmatprep.subr.mxu0 0.0
        %293 = vmatpush2.msra.mxu0 0.0
        %294 = vmatprep.subr.mxu0 0.0
        %295 = vmatpush2.msra.mxu0 0.0
        %296 = vmatprep.subr.mxu0 0.0
        %297 = vmatpush2.msra.mxu0 0.0
        %298 = vmatprep.subr.mxu0 0.0
        %299 = vmatpush2.msra.mxu0 0.0
        %300 = vmatprep.subr.mxu0 0.0
        %301 = vmatpush2.msra.mxu0 0.0
        %302 = vmatprep.subr.mxu0 0.0
        %303 = vmatpush2.msra.mxu0 0.0
        %304 = vmatprep.subr.mxu0 0.0
        %305 = vmatpush2.msra.mxu0 0.0
        %306 = vmatprep.subr.mxu0 0.0
        %307 = vmatpush2.msra.mxu0 0.0
        %308 = vmatprep.subr.mxu0 0.0
        %309 = vmatpush2.msra.mxu0 0.0
        %310 = vmatprep.subr.mxu0 0.0
        %311 = vmatpush2.msra.mxu0 0.0
        %312 = vmatprep.subr.mxu0 0.0
        %313 = vmatpush2.msra.mxu0 0.0
        %314 = vmatprep.subr.mxu0 0.0
        %315 = vmatpush2.msra.mxu0 0.0
        %316 = vmatprep.subr.mxu0 0.0
        %317 = vmatpush2.msra.mxu0 0.0
        %318 = vmatprep.mubr.f32.mxu0 0.0
        %319 = vmatmul.mubr.f32.gmra.mxu0 %v252
        %v320 = vpop.f32.mrf.mxu0
        %v321 = vadd.f32 %v248, %v320
        %v322 = vpop.f32.mrf.mxu0
        %323 = vdwg.mxu0
        %vm324 = vcmask 130048
        %v325 = vsel %vm324, %v321, -inf
        %326 = vmax.xlane.f32.xlu0 %v325
        %v327 = vpop.xlane.xlu0 %326
        %v328 = vsub.f32 %v321, %v327
        %v329 = vmul.f32 %v328, 1.442695
        %v330 = vpow.pop %v329
        %v331 = vsel %vm324, %v330, 0.0
        %332 = vadd.xlane.f32.xlu0 %v331
        %v333 = vpop.xlane.xlu0 %332
        %v334 = vrcp.pop %v333
        %v335 = vmul.f32 %v330, %v334
        %v337 = vsel %vm324, %v335, 0
        %339 = vmatprep.subr.mxu0 0.0
        %340 = vmatpush1.msra.mxu0 0.0
        %341 = vmatprep.subr.mxu0 0.0
        %342 = vmatpush1.msra.mxu0 0.0
        %343 = vmatprep.subr.mxu0 0.0
        %344 = vmatpush1.msra.mxu0 0.0
        %345 = vmatprep.subr.mxu0 0.0
        %346 = vmatpush1.msra.mxu0 0.0
        %347 = vmatprep.subr.mxu0 0.0
        %348 = vmatpush1.msra.mxu0 0.0
        %349 = vmatprep.subr.mxu0 0.0
        %350 = vmatpush1.msra.mxu0 0.0
        %351 = vmatprep.subr.mxu0 0.0
        %352 = vmatpush1.msra.mxu0 0.0
        %353 = vmatprep.subr.mxu0 0.0
        %354 = vmatpush1.msra.mxu0 0.0
        %355 = vmatprep.subr.mxu0 0.0
        %356 = vmatpush1.msra.mxu0 0.0
        %357 = vmatprep.subr.mxu0 0.0
        %358 = vmatpush1.msra.mxu0 0.0
        %359 = vmatprep.subr.mxu0 0.0
        %360 = vmatpush1.msra.mxu0 0.0
        %361 = vmatprep.subr.mxu0 0.0
        %362 = vmatpush1.msra.mxu0 0.0
        %363 = vmatprep.subr.mxu0 0.0
        %364 = vmatpush1.msra.mxu0 0.0
        %365 = vmatprep.subr.mxu0 0.0
        %366 = vmatpush1.msra.mxu0 0.0
        %367 = vmatprep.subr.mxu0 0.0
        %368 = vmatpush1.msra.mxu0 %v240
        %369 = vmatprep.subr.mxu0 0.0
        %370 = vmatpush1.msra.mxu0 %v239
        %371 = vmatprep.subr.mxu0 0.0
        %372 = vmatpush2.msra.mxu0 0.0
        %373 = vmatprep.subr.mxu0 0.0
        %374 = vmatpush2.msra.mxu0 0.0
        %375 = vmatprep.subr.mxu0 0.0
        %376 = vmatpush2.msra.mxu0 0.0
        %377 = vmatprep.subr.mxu0 0.0
        %378 = vmatpush2.msra.mxu0 0.0
        %379 = vmatprep.subr.mxu0 0.0
        %380 = vmatpush2.msra.mxu0 0.0
        %381 = vmatprep.subr.mxu0 0.0
        %382 = vmatpush2.msra.mxu0 0.0
        %383 = vmatprep.subr.mxu0 0.0
        %384 = vmatpush2.msra.mxu0 0.0
        %385 = vmatprep.subr.mxu0 0.0
        %386 = vmatpush2.msra.mxu0 0.0
        %387 = vmatprep.subr.mxu0 0.0
        %388 = vmatpush2.msra.mxu0 0.0
        %389 = vmatprep.subr.mxu0 0.0
        %390 = vmatpush2.msra.mxu0 0.0
        %391 = vmatprep.subr.mxu0 0.0
        %392 = vmatpush2.msra.mxu0 0.0
        %393 = vmatprep.subr.mxu0 0.0
        %394 = vmatpush2.msra.mxu0 0.0
        %395 = vmatprep.subr.mxu0 0.0
        %396 = vmatpush2.msra.mxu0 0.0
        %397 = vmatprep.subr.mxu0 0.0
        %398 = vmatpush2.msra.mxu0 0.0
        %399 = vmatprep.subr.mxu0 0.0
        %400 = vmatpush2.msra.mxu0 0.0
        %401 = vmatprep.subr.mxu0 0.0
        %402 = vmatpush2.msra.mxu0 0.0
        %403 = vmatprep.mubr.f32.mxu0 0.0
        %404 = vmatmul.mubr.f32.gmra.mxu0 %v337
        %v405 = vpop.f32.mrf.mxu0
        %v406 = vadd.f32 0.0, %v405
        %v407 = vpop.f32.mrf.mxu0
        %408 = vdwg.mxu0
        %vm409 = vcmask 130052
        %v410 = vsel %vm409, %v335, 0.0
        %411 = vadd.xlane.f32.xlu0 %v410
        %v412 = vpop.xlane.xlu0 %411
        %v413 = vsub.f32 %v412, %v406
        %v414 = vadd.f32 %v413, %v335
        %v416 = vrot.slane %v414, 4
        %v418 = vmul.f32 %v406, %v416
        %vm419 = vcmask 125952
        %v420 = vsel %vm419, %v418, 0.0
        %421 = vadd.xlane.f32.xlu0 %v420
        %v422 = vpop.xlane.xlu0 %421
        %v423 = vadd.f32 %v422, 1e-08
        %v424 = vrcp.pop %v423
        %v425 = vmul.f32 %v418, %v424
        %v426 = vld [vmem:[%s236] sm:$0x1]
        %v428 = vlaneseq
        %v429 = vshrl.u32 %v428, 7
        %v430 = vsub.s32 0, %v429
        %v431 = vrot.slane %v426, %v430
        %v433 = vmul.f32 %v425, %v431
        %434 = vst.msk [vmem:[%s228] sm:$0xf] %vm419, %v433
        %s435 = sand.u32 %s142, 1
        %s436 = scalar_lea.sflag [#allocation3], %s435
        %s437 = sand.u32 %s142, 1
        %s438 = smul.addr %s437, 4
        %s439 = scalar_lea.vmem [#allocation2], %s438
        // Predicated region
        $region41: #{tpu_custom_call.1} parent=39 // pred_check
          %p440 = pneg %p152
        $region42: #{tpu_custom_call.1} parent=39 // pred_check_branch
          %442 = sbr.rel (%p440) target = $region44
        $region43: #{tpu_custom_call.1} parent=39 // pred_region
          %s444 = ssub.s32 64, 64
          %445 = vsyncadd %s436, %s444
          %s446 = smul.addr %s19, 64
          %s447 = scalar_lea.hbm %s5, %s446
          %s449 = sshll.u32 %s439, 4
          %s450 = int_to_ptr.vmem [resolvable:$true] %s449
          %452 = dma.vmem_to_hbm [thread:$0]  %s450, 64, %s447, %s436
        $region44: #{tpu_custom_call.1} parent=39 // pred_fallthru
          _
      $region40: #{tpu_custom_call.1} parent=5 // pred_fallthru
        _
      %p453 = scmp.le.s32.totalorder 2, %s14
      // Predicated region
      $region45: #{tpu_custom_call.1} parent=5 // pred_check
        %p454 = pneg %p453
      $region46: #{tpu_custom_call.1} parent=5 // pred_check_branch
        %456 = sbr.rel (%p454) target = $region48
      $region47: #{tpu_custom_call.1} parent=5 // pred_region
        %s457 = ssub.s32 %s14, 2
        // Predicated region
        $region49: #{tpu_custom_call.1} parent=47 // pred_check
          %p458 = pneg %p158
        $region50: #{tpu_custom_call.1} parent=47 // pred_check_branch
          %460 = sbr.rel (%p458) target = $region52
        $region51: #{tpu_custom_call.1} parent=47 // pred_region
          %s461 = sand.u32 %s143, 1
          %s462 = scalar_lea.sflag [#allocation3], %s461
          %s463 = sand.u32 %s143, 1
          %s464 = smul.addr %s463, 4
          %s465 = scalar_lea.vmem [#allocation2], %s464
          %466 = dma.done %s462, 64
        $region52: #{tpu_custom_call.1} parent=47 // pred_fallthru
          _
      $region48: #{tpu_custom_call.1} parent=5 // pred_fallthru
        _
    $region6: #{tpu_custom_call.1} parent=1 // loop_footer
      %s18 = sadd.s32 1, %s14
    $region7: #{tpu_custom_call.1} parent=1 // loop_footer_branch
      %13 = sbr.rel target = $region3
    $region8: #{tpu_custom_call.1} parent=1 // loop_exit
      _
    %467 = vsyncpa [#allocation3], 1
    %s468 = scalar_lea.sflag [#allocation3], 1
    %469 = vsyncpa %s468, 1

</llo_original>
